<compile_context>
chip_gen: v7x
topology: tpu7x:2x2x1
jax: 0.10.0
libtpu: 0.0.40
codegen_flags: <defaults>
</compile_context>

<pallas_src>
import functools
import math

import jax
import jax.numpy as jnp
from jax.experimental import pallas as pl
from jax.experimental.pallas import tpu as pltpu

_MIB = 1024 * 1024


def _rms_norm_kernel(x_ref, w_ref, b_ref, o_ref, *, eps):
    # Normalize in float32 (matches torch.autocast(enabled=False) + .to(f32)).
    x32 = x_ref[...].astype(jnp.float32)
    var = jnp.mean(x32 * x32, axis=-1, keepdims=True)
    xn = x32 * jax.lax.rsqrt(var + eps)
    # Round back to the original dtype BEFORE the affine, exactly like the
    # PyTorch forward.  (No-op when x is already float32.)
    xn = xn.astype(x_ref.dtype)
    # weight * x + bias in the promoted (output) dtype; all casts below are
    # trace-time no-ops when everything is already that dtype.
    out_dt = o_ref.dtype
    o_ref[...] = (w_ref[...].astype(out_dt) * xn.astype(out_dt)
                  + b_ref[...].astype(out_dt))


def _vmem_capacity_bytes():
    try:
        return int(pltpu.get_tpu_info().vmem_capacity_bytes)
    except Exception:
        return 64 * _MIB  # conservative default (v7x per-TC size)


def _budgets(vmem_capacity_bytes):
    """Return (tile_budget, vmem_limit_cap) for this VMEM generation."""
    if vmem_capacity_bytes >= 128 * _MIB:       # v5e / v6e: 128 MiB per core
        return 64 * _MIB, 96 * _MIB
    return 24 * _MIB, 48 * _MIB                 # v7x (64 MiB per TC) / unknown


def _f32_temp_count(x_bytes, o_bytes):
    # Budget the f32 temporaries (x32, xn) Mosaic materializes: they are the
    # same size as an f32 tile, i.e. 2x a bf16 input tile.
    return 2 if (x_bytes < 4 or o_bytes < 4) else 1


def _pick_row_tile(rows, hidden, x_bytes, o_bytes, tile_budget):
    """Largest row tile whose double-buffered in/out tiles + f32 temps fit."""
    f32_temps = _f32_temp_count(x_bytes, o_bytes)
    bytes_per_row = 2 * hidden * (x_bytes + o_bytes) + f32_temps * hidden * 4
    tile = tile_budget // max(bytes_per_row, 1)
    tile = int(max(8, min(8192, (tile // 8) * 8)))   # multiple of 8, no 1K cap
    rows_up = ((rows + 7) // 8) * 8                  # no point exceeding rows
    return max(8, min(tile, rows_up))


def rms_layer_norm(x, weight, bias, *, eps=1e-5, row_tile=None, deep_buffer=None):
    """x: [..., hidden]; weight, bias: [hidden]."""
    orig_shape = x.shape
    hidden = orig_shape[-1]
    rows = int(math.prod(orig_shape[:-1])) if len(orig_shape) > 1 else 1
    x2d = x.reshape(rows, hidden)
    w2d = weight.reshape(1, hidden)
    b2d = bias.reshape(1, hidden)

    # Matches PyTorch promotion of `weight * x + bias`.
    out_dtype = jnp.result_type(x.dtype, weight.dtype, bias.dtype)
    x_bytes = jnp.dtype(x.dtype).itemsize
    o_bytes = jnp.dtype(out_dtype).itemsize
    w_bytes = jnp.dtype(weight.dtype).itemsize
    b_bytes = jnp.dtype(bias.dtype).itemsize

    tile_budget, vmem_cap = _budgets(_vmem_capacity_bytes())

    if row_tile is None:
        row_tile = _pick_row_tile(rows, hidden, x_bytes, o_bytes, tile_budget)
        # Guarantee >= 2 grid steps whenever there is more than one row group
        # so both TensorCores get work on v7x ("parallel" grid axis).
        if rows > 8:
            half = ((-(-rows // 2)) + 7) // 8 * 8
            row_tile = min(row_tile, half)
    row_tile = int(max(8, (row_tile // 8) * 8))

    num_steps = pl.cdiv(rows, row_tile)
    grid = (num_steps,)

    # Deep (3x) buffering on the streaming input only helps when tiles are
    # small and there are enough steps to pipeline (mostly a v7x concern).
    if deep_buffer is None:
        deep_buffer = (num_steps >= 4) and (row_tile * hidden * x_bytes <= 1 * _MIB)
    x_spec = pl.BlockSpec((row_tile, hidden), lambda i: (i, 0))
    n_x_buf = 2
    if deep_buffer:
        try:
            x_spec = pl.BlockSpec((row_tile, hidden), lambda i: (i, 0),
                                  pipeline_mode=pl.Buffered(3))
            n_x_buf = 3
        except TypeError:
            pass  # older pallas without pipeline_mode: keep default buffering

    # VMEM budget: n_x_buf input tiles + double-buffered output tiles + f32
    # intermediates + params + slack, capped per generation.
    f32_temps = _f32_temp_count(x_bytes, o_bytes)
    tile_bytes = row_tile * hidden * (n_x_buf * x_bytes + 2 * o_bytes + f32_temps * 4)
    param_bytes = 2 * 2 * hidden * 4
    vmem_limit = int(min(vmem_cap,
                         max(16 * _MIB, tile_bytes + param_bytes + 4 * _MIB)))

    # Advisory cost estimate so XLA can overlap surrounding HBM traffic.
    cost = pl.CostEstimate(
        flops=int(5 * rows * hidden),
        transcendentals=int(rows),
        bytes_accessed=int(rows * hidden * (x_bytes + o_bytes)
                           + hidden * (w_bytes + b_bytes)),
    )

    out = pl.pallas_call(
        functools.partial(_rms_norm_kernel, eps=eps),
        out_shape=jax.ShapeDtypeStruct((rows, hidden), out_dtype),
        grid_spec=pltpu.PrefetchScalarGridSpec(
            num_scalar_prefetch=0,
            grid=grid,
            in_specs=[
                x_spec,
                # weight / bias are grid-invariant; tiny, default buffering.
                pl.BlockSpec((1, hidden), lambda i: (0, 0)),
                pl.BlockSpec((1, hidden), lambda i: (0, 0)),
            ],
            out_specs=pl.BlockSpec((row_tile, hidden), lambda i: (i, 0)),
        ),
        compiler_params=pltpu.CompilerParams(
            dimension_semantics=("parallel",),
            vmem_limit_bytes=vmem_limit),
        cost_estimate=cost,
    )(x2d, w2d, b2d)

    return out.reshape(*orig_shape[:-1], hidden)


def rms_layer_norm_ref(x, weight, bias, eps=1e-5):
    og_dtype = x.dtype
    x32 = x.astype(jnp.float32)
    var = jnp.mean(x32 * x32, axis=-1, keepdims=True)
    xn = (x32 * jax.lax.rsqrt(var + eps)).astype(og_dtype)
    return weight * xn + bias


if __name__ == "__main__":
    key = jax.random.PRNGKey(0)
    keys = jax.random.split(key, 8)
    eps = 1e-5

    def check(x, weight, bias, tol, **kw):
        out = jax.block_until_ready(rms_layer_norm(x, weight, bias, eps=eps, **kw))
        ref = rms_layer_norm_ref(x, weight, bias, eps=eps)
        assert out.shape == ref.shape and out.dtype == ref.dtype
        o32 = out.astype(jnp.float32)
        r32 = ref.astype(jnp.float32)
        err = jnp.max(jnp.abs(o32 - r32))
        assert jnp.allclose(o32, r32, atol=tol, rtol=tol), f"max abs err {err}"

    hidden = 128
    # Module init is ones/zeros; add a small deterministic perturbation so the
    # affine path is actually exercised.
    weight = jnp.ones((hidden,), jnp.float32) \
        + 0.01 * jax.random.normal(keys[0], (hidden,), dtype=jnp.float32)
    bias = jnp.zeros((hidden,), jnp.float32) \
        + 0.01 * jax.random.normal(keys[1], (hidden,), dtype=jnp.float32)

    # Case 1: ragged row count (rows=14 not a multiple of the row tile).
    check(jax.random.normal(keys[2], (2, 7, hidden), jnp.float32), weight, bias, 1e-5)

    # Case 2: row count exactly divisible by the row tile.
    check(jax.random.normal(keys[3], (2, 8, hidden), jnp.float32), weight, bias, 1e-5)

    # Case 3: bf16 activations, f32 params (promoted f32 output; exercises the
    # f32-intermediate VMEM budgeting path).
    xb = jax.random.normal(keys[4], (2, 5, hidden), jnp.float32).astype(jnp.bfloat16)
    check(xb, weight, bias, 3e-2)

    # Case 4: hidden size not a multiple of 128 (masked lane stores).
    h2 = 200
    w2 = jnp.ones((h2,), jnp.float32) \
        + 0.01 * jax.random.normal(keys[5], (h2,), dtype=jnp.float32)
    b2 = jnp.zeros((h2,), jnp.float32) \
        + 0.01 * jax.random.normal(keys[6], (h2,), dtype=jnp.float32)
    check(jax.random.normal(keys[7], (3, 4, h2), jnp.float32), w2, b2, 1e-5)

    # Case 5: many small grid steps (user-forced tiny tile) — exercises the
    # multi-step / deep-buffering path.
    check(jax.random.normal(keys[2], (6, 8, hidden), jnp.float32), weight, bias,
          1e-5, row_tile=8)

    print("KERNEL_OK")
</pallas_src>

<mosaic_0001>
module attributes {stable_mosaic.version = 11 : i64} {
  func.func @_rms_norm_kernel(%arg0: i32, %arg1: memref<8x128xf32, #tpu.memory_space<vmem>>, %arg2: memref<1x128xf32, #tpu.memory_space<vmem>>, %arg3: memref<1x128xf32, #tpu.memory_space<vmem>>, %arg4: memref<8x128xf32, #tpu.memory_space<vmem>>) attributes {dimension_semantics = [#tpu.dimension_semantics<parallel>], iteration_bounds = array<i64: 2>, scalar_prefetch = 0 : i64, scratch_operands = 0 : i64, tpu.core_type = #tpu.core_type<tc>, window_params = [{transform_indices = @transform_0, window_bounds = array<i64: 8, 128>}, {pipeline_mode = #tpu.pipeline_mode<synchronous>, transform_indices = @transform_1, window_bounds = array<i64: 1, 128>}, {pipeline_mode = #tpu.pipeline_mode<synchronous>, transform_indices = @transform_2, window_bounds = array<i64: 1, 128>}, {transform_indices = @transform_3, window_bounds = array<i64: 8, 128>}]} {
    %c0 = arith.constant 0 : index
    %c0_0 = arith.constant 0 : index
    %0 = vector.load %arg1[%c0, %c0_0] : memref<8x128xf32, #tpu.memory_space<vmem>>, vector<8x128xf32>
    %1 = arith.mulf %0, %0 : vector<8x128xf32>
    %cst = arith.constant dense<0.000000e+00> : vector<8xf32>
    %2 = vector.multi_reduction <add>, %1, %cst [1] : vector<8x128xf32> to vector<8xf32>
    %3 = vector.shape_cast %2 : vector<8xf32> to vector<8x1xf32>
    %cst_1 = arith.constant 1.280000e+02 : f32
    %4 = vector.broadcast %cst_1 : f32 to vector<8x1xf32>
    %5 = arith.divf %3, %4 : vector<8x1xf32>
    %cst_2 = arith.constant 9.99999974E-6 : f32
    %6 = vector.broadcast %cst_2 : f32 to vector<8x1xf32>
    %7 = arith.addf %5, %6 : vector<8x1xf32>
    %8 = math.rsqrt %7 : vector<8x1xf32>
    %9 = vector.broadcast %8 : vector<8x1xf32> to vector<8x128xf32>
    %10 = arith.mulf %0, %9 : vector<8x128xf32>
    %c0_3 = arith.constant 0 : index
    %c0_4 = arith.constant 0 : index
    %11 = vector.load %arg2[%c0_3, %c0_4] : memref<1x128xf32, #tpu.memory_space<vmem>>, vector<1x128xf32>
    %12 = vector.broadcast %11 : vector<1x128xf32> to vector<8x128xf32>
    %13 = arith.mulf %12, %10 : vector<8x128xf32>
    %c0_5 = arith.constant 0 : index
    %c0_6 = arith.constant 0 : index
    %14 = vector.load %arg3[%c0_5, %c0_6] : memref<1x128xf32, #tpu.memory_space<vmem>>, vector<1x128xf32>
    %15 = vector.broadcast %14 : vector<1x128xf32> to vector<8x128xf32>
    %16 = arith.addf %13, %15 : vector<8x128xf32>
    %c0_7 = arith.constant 0 : index
    %c0_8 = arith.constant 0 : index
    %17 = vector.load %arg4[%c0_7, %c0_8] : memref<8x128xf32, #tpu.memory_space<vmem>>, vector<8x128xf32>
    tpu.vector_store %arg4[%c0_7, %c0_8], %16 {strides = array<i32>} : memref<8x128xf32, #tpu.memory_space<vmem>>, vector<8x128xf32>,
    return
  }
  func.func @transform_0(%arg0: i32) -> (i32, i32) {
    %c0_i32 = arith.constant 0 : i32
    %c0_i32_0 = arith.constant 0 : i32
    return %arg0, %c0_i32 : i32, i32
  }
  func.func @transform_1(%arg0: i32) -> (i32, i32) {
    %c0_i32 = arith.constant 0 : i32
    %c0_i32_0 = arith.constant 0 : i32
    %c0_i32_1 = arith.constant 0 : i32
    return %c0_i32, %c0_i32_0 : i32, i32
  }
  func.func @transform_2(%arg0: i32) -> (i32, i32) {
    %c0_i32 = arith.constant 0 : i32
    %c0_i32_0 = arith.constant 0 : i32
    %c0_i32_1 = arith.constant 0 : i32
    return %c0_i32, %c0_i32_0 : i32, i32
  }
  func.func @transform_3(%arg0: i32) -> (i32, i32) {
    %c0_i32 = arith.constant 0 : i32
    %c0_i32_0 = arith.constant 0 : i32
    return %arg0, %c0_i32 : i32, i32
  }
}

</mosaic_0001>

<llo_original>
// kernel: tpu_custom_call.1
$region0: #{tpu_custom_call.1}
  #allocation0 [shape = 'u32[]', space=smem, size = 0x4, offset = 0x4, fixed_abs, tag = 'smem constant byte address 0x4 - core index']
  #allocation1 [shape = 'u32[144,128]{1,0:T(1,128)}', space=vmem, size = 0x12000, scoped, tag = 'internal scratch']
  %s0 = inlined_call_operand.hbm [shape: f32[14,128], index: 0, kind: input, shape index: {}]
  %s1 = inlined_call_operand.vmem [shape: f32[1,128], index: 1, kind: input, shape index: {}]
  %s2 = inlined_call_operand.vmem [shape: f32[1,128], index: 2, kind: input, shape index: {}]
  %s3 = inlined_call_operand.hbm [shape: f32[14,128], index: 3, kind: output, shape index: {}]
  %s4 = sld [smem:[#allocation0]]
  $region49: #{tpu_custom_call.1} parent=0
    _
  %s6 = ssub.s32 1, %s4
  %s7 = scalar_select 0, %s6, %s4
  $region1: #{tpu_custom_call.1} parent=0
    #allocation2 [shape = 'u8[8192]{0}', space=vmem, size = 0x2000, scoped, tag = 'input window, operand 0']
    #allocation3 [shape = 's32[2]{0}', space=sflag, size = 0x8, scoped, tag = 'scoped memory for tpu_custom_call.1']
    #allocation4 [shape = 's32[2]{0}', space=sflag, size = 0x8, scoped, tag = 'scoped memory for tpu_custom_call.1']
    #allocation5 [shape = 'u8[8192]{0}', space=vmem, size = 0x2000, scoped, tag = 'output window, operand 0']
    %8 = vsyncpa [#allocation3], 0
    %s9 = scalar_lea.sflag [#allocation3], 1
    %10 = vsyncpa %s9, 0
    %11 = vsyncpa [#allocation4], 0
    %s12 = scalar_lea.sflag [#allocation4], 1
    %13 = vsyncpa %s12, 0
    loop: start=0, step=1, limit=4
    $region2: #{tpu_custom_call.1} parent=1 // loop_pre_header
      _
    $region3: #{tpu_custom_call.1} parent=1 // loop_header
      %s15 = sphi 0, %s19
      %p16 = scmp.ge.s32.totalorder %s15, 4
      %s25 = sphi 0, %s27
      %s28 = sphi 0, %s25
      %s29 = sphi 0, %s28
      %s45 = sphi 0, %s29
      %s49 = sphi 0, %s49
      %s51 = sphi 0, %s49
      %s52 = sphi 0, %s51
      %s66 = sphi 0, %s52
      %s70 = sphi 0, %s70
      %s72 = sphi 0, %s70
      %s73 = sphi 0, %s72
      %s87 = sphi 0, %s73
      %s93 = sphi 0, %s95
      %s96 = sphi 0, %s93
      %s97 = sphi 0, %s96
      %s113 = sphi 0, %s97
    $region4: #{tpu_custom_call.1} parent=1 // loop_header_branch
      %18 = sbr.rel (%p16) target = $region8
    $region5: #{tpu_custom_call.1} parent=1 // loop_body
      %s20 = ssub.s32 %s15, 1
      %s21 = ssub.s32 %s15, 2
      %s22 = sadd.s32 %s15, 1
      %s23 = ssub.s32 %s15, %s22
      %p24 = scmp.eq.s32.totalorder %s23, 0
      %s26 = sadd.s32 %s25, 1
      %s27 = scalar_select %p24, %s25, %s26
      %p30 = pneg %p24
      %p31 = scmp.eq.s32.totalorder %s15, 1
      %p32 = por %p30, %p31
      %p33 = scmp.ne.s32.totalorder %s25, %s28
      %p34 = scmp.eq.s32.totalorder %s15, 0
      %p35 = por %p33, %p34
      %p36 = scmp.ne.s32.totalorder %s25, %s28
      %p37 = scmp.eq.s32.totalorder %s20, 1
      %p38 = por %p36, %p37
      %p39 = scmp.ne.s32.totalorder %s28, %s29
      %p40 = scmp.eq.s32.totalorder %s20, 0
      %p41 = por %p39, %p40
      %p42 = scmp.ne.s32.totalorder %s28, %s29
      %p43 = scmp.eq.s32.totalorder %s21, 1
      %p44 = por %p42, %p43
      %p46 = scmp.ne.s32.totalorder %s29, %s45
      %p47 = scmp.eq.s32.totalorder %s21, 0
      %p48 = por %p46, %p47
      %s50 = sadd.s32 %s49, 1
      %p53 = scmp.eq.s32.totalorder %s15, 1
      %p54 = scmp.ne.s32.totalorder %s49, %s51
      %p55 = scmp.eq.s32.totalorder %s15, 0
      %p56 = por %p54, %p55
      %p57 = scmp.ne.s32.totalorder %s49, %s51
      %p58 = scmp.eq.s32.totalorder %s20, 1
      %p59 = por %p57, %p58
      %p60 = scmp.ne.s32.totalorder %s51, %s52
      %p61 = scmp.eq.s32.totalorder %s20, 0
      %p62 = por %p60, %p61
      %p63 = scmp.ne.s32.totalorder %s51, %s52
      %p64 = scmp.eq.s32.totalorder %s21, 1
      %p65 = por %p63, %p64
      %p67 = scmp.ne.s32.totalorder %s52, %s66
      %p68 = scmp.eq.s32.totalorder %s21, 0
      %p69 = por %p67, %p68
      %s71 = sadd.s32 %s70, 1
      %p74 = scmp.eq.s32.totalorder %s15, 1
      %p75 = scmp.ne.s32.totalorder %s70, %s72
      %p76 = scmp.eq.s32.totalorder %s15, 0
      %p77 = por %p75, %p76
      %p78 = scmp.ne.s32.totalorder %s70, %s72
      %p79 = scmp.eq.s32.totalorder %s20, 1
      %p80 = por %p78, %p79
      %p81 = scmp.ne.s32.totalorder %s72, %s73
      %p82 = scmp.eq.s32.totalorder %s20, 0
      %p83 = por %p81, %p82
      %p84 = scmp.ne.s32.totalorder %s72, %s73
      %p85 = scmp.eq.s32.totalorder %s21, 1
      %p86 = por %p84, %p85
      %p88 = scmp.ne.s32.totalorder %s73, %s87
      %p89 = scmp.eq.s32.totalorder %s21, 0
      %p90 = por %p88, %p89
      %s91 = ssub.s32 %s15, %s22
      %p92 = scmp.eq.s32.totalorder %s91, 0
      %s94 = sadd.s32 %s93, 1
      %s95 = scalar_select %p92, %s93, %s94
      %p98 = pneg %p92
      %p99 = scmp.eq.s32.totalorder %s15, 1
      %p100 = por %p98, %p99
      %p101 = scmp.ne.s32.totalorder %s93, %s96
      %p102 = scmp.eq.s32.totalorder %s15, 0
      %p103 = por %p101, %p102
      %p104 = scmp.ne.s32.totalorder %s93, %s96
      %p105 = scmp.eq.s32.totalorder %s20, 1
      %p106 = por %p104, %p105
      %p107 = scmp.ne.s32.totalorder %s96, %s97
      %p108 = scmp.eq.s32.totalorder %s20, 0
      %p109 = por %p107, %p108
      %p110 = scmp.ne.s32.totalorder %s96, %s97
      %p111 = scmp.eq.s32.totalorder %s21, 1
      %p112 = por %p110, %p111
      %p114 = scmp.ne.s32.totalorder %s97, %s113
      %p115 = scmp.eq.s32.totalorder %s21, 0
      %p116 = por %p114, %p115
      %p117 = scmp.le.s32.totalorder 1, %s15
      %p118 = scmp.lt.s32.totalorder %s15, 3
      %p119 = pnand %p117, %p118
      %p120 = pneg %p119
      // Predicated region
      $region9: #{tpu_custom_call.1} parent=5 // pred_check
        _
      $region10: #{tpu_custom_call.1} parent=5 // pred_check_branch
        %122 = sbr.rel (%p119) target = $region12
      $region11: #{tpu_custom_call.1} parent=5 // pred_region
        %s123 = ssub.s32 %s15, 1
        // Predicated region
        $region13: #{tpu_custom_call.1} parent=11 // pred_check
          %p124 = pneg %p62
        $region14: #{tpu_custom_call.1} parent=11 // pred_check_branch
          %126 = sbr.rel (%p124) target = $region16
        $region15: #{tpu_custom_call.1} parent=11 // pred_region
          _
        $region16: #{tpu_custom_call.1} parent=11 // pred_fallthru
          _
        // Predicated region
        $region17: #{tpu_custom_call.1} parent=11 // pred_check
          %p127 = pneg %p83
        $region18: #{tpu_custom_call.1} parent=11 // pred_check_branch
          %129 = sbr.rel (%p127) target = $region20
        $region19: #{tpu_custom_call.1} parent=11 // pred_region
          _
        $region20: #{tpu_custom_call.1} parent=11 // pred_fallthru
          _
      $region12: #{tpu_custom_call.1} parent=5 // pred_fallthru
        _
      %p130 = scmp.lt.s32.totalorder %s15, 2
      // Predicated region
      $region21: #{tpu_custom_call.1} parent=5 // pred_check
        %p131 = pneg %p130
      $region22: #{tpu_custom_call.1} parent=5 // pred_check_branch
        %133 = sbr.rel (%p131) target = $region24
      $region23: #{tpu_custom_call.1} parent=5 // pred_region
        // Predicated region
        $region25: #{tpu_custom_call.1} parent=23 // pred_check
          %p134 = pneg %p35
        $region26: #{tpu_custom_call.1} parent=23 // pred_check_branch
          %136 = sbr.rel (%p134) target = $region28
        $region27: #{tpu_custom_call.1} parent=23 // pred_region
          %s137 = sand.u32 %s25, 1
          %s138 = scalar_lea.sflag [#allocation3], %s137
          %s139 = sand.u32 %s25, 1
          %s140 = smul.addr %s139, 8
          %s141 = scalar_lea.vmem [#allocation2], %s140
          %s143 = ssub.s32 128, 128
          %144 = vsyncadd %s138, %s143
          %s145 = smul.addr %s15, 128
          %s146 = scalar_lea.hbm %s0, %s145
          %s148 = sshll.u32 %s141, 4
          %s149 = int_to_ptr.vmem [resolvable:$true] %s148
          %151 = dma.hbm_to_vmem [thread:$0]  %s146, 128, %s149, %s138
        $region28: #{tpu_custom_call.1} parent=23 // pred_fallthru
          _
      $region24: #{tpu_custom_call.1} parent=5 // pred_fallthru
        _
      %p152 = scmp.le.s32.totalorder 1, %s15
      %p153 = scmp.lt.s32.totalorder %s15, 3
      %p154 = pnand %p152, %p153
      %p155 = pneg %p154
      // Predicated region
      $region29: #{tpu_custom_call.1} parent=5 // pred_check
        _
      $region30: #{tpu_custom_call.1} parent=5 // pred_check_branch
        %157 = sbr.rel (%p154) target = $region32
      $region31: #{tpu_custom_call.1} parent=5 // pred_region
        %s158 = ssub.s32 %s15, 1
        %s159 = sand.u32 %s28, 1
        %s160 = scalar_lea.sflag [#allocation3], %s159
        %s161 = sand.u32 %s28, 1
        %s162 = smul.addr %s161, 8
        %s163 = scalar_lea.vmem [#allocation2], %s162
        // Predicated region
        $region33: #{tpu_custom_call.1} parent=31 // pred_check
          %p164 = pneg %p41
        $region34: #{tpu_custom_call.1} parent=31 // pred_check_branch
          %166 = sbr.rel (%p164) target = $region36
        $region35: #{tpu_custom_call.1} parent=31 // pred_region
          %167 = dma.done %s160, 128
        $region36: #{tpu_custom_call.1} parent=31 // pred_fallthru
          _
        %s168 = sand.u32 %s28, 1
        %s169 = scalar_lea.sflag [#allocation3], %s168
        %s170 = sand.u32 %s28, 1
        %s171 = smul.addr %s170, 8
        %s172 = scalar_lea.vmem [#allocation2], %s171
        %p173 = pneg %p41
        %p174 = pneg %p38
        %p175 = pneg %p62
        %p176 = pneg %p59
        %p177 = pneg %p83
        %p178 = pneg %p80
        %p179 = pneg %p109
        %p180 = pneg %p106
        %s181 = sand.u32 %s96, 1
        %s182 = scalar_lea.sflag [#allocation4], %s181
        %s183 = sand.u32 %s96, 1
        %s184 = smul.addr %s183, 8
        %s185 = scalar_lea.vmem [#allocation5], %s184
        %v186 = vld [vmem:[%s163] sm:$0xff]
        %v187 = vmul.f32 %v186, %v186
        %188 = vadd.xlane.f32.xlu0 %v187
        %v189 = vpop.xlane.xlu0 %188
        %v190 = vrcp.pop 128.0
        %v191 = vmul.f32 %v189, %v190
        %v192 = vadd.f32 %v191, 1e-05
        %v193 = vrsqrt.pop %v192
        %v194 = vmul.f32 %v186, %v193
        %v195 = vld [vmem:[%s1] sm:$0x1]
        %v197 = vlaneseq
        %v198 = vshrl.u32 %v197, 7
        %v199 = vsub.s32 0, %v198
        %v200 = vrot.slane %v195, %v199
        %v202 = vmul.f32 %v200, %v194
        %v203 = vld [vmem:[%s2] sm:$0x1]
        %v205 = vlaneseq
        %v206 = vshrl.u32 %v205, 7
        %v207 = vsub.s32 0, %v206
        %v208 = vrot.slane %v203, %v207
        %v210 = vadd.f32 %v202, %v208
        %211 = vst [vmem:[%s185] sm:$0xff] %v210
        %s212 = sand.u32 %s96, 1
        %s213 = scalar_lea.sflag [#allocation4], %s212
        %s214 = sand.u32 %s96, 1
        %s215 = smul.addr %s214, 8
        %s216 = scalar_lea.vmem [#allocation5], %s215
        // Predicated region
        $region37: #{tpu_custom_call.1} parent=31 // pred_check
          %p217 = pneg %p106
        $region38: #{tpu_custom_call.1} parent=31 // pred_check_branch
          %219 = sbr.rel (%p217) target = $region40
        $region39: #{tpu_custom_call.1} parent=31 // pred_region
          %s221 = ssub.s32 128, 128
          %222 = vsyncadd %s213, %s221
          %s223 = smul.addr %s20, 128
          %s224 = scalar_lea.hbm %s3, %s223
          %s226 = sshll.u32 %s216, 4
          %s227 = int_to_ptr.vmem [resolvable:$true] %s226
          %229 = dma.vmem_to_hbm [thread:$0]  %s227, 128, %s224, %s213
        $region40: #{tpu_custom_call.1} parent=31 // pred_fallthru
          _
      $region32: #{tpu_custom_call.1} parent=5 // pred_fallthru
        _
      %p230 = scmp.le.s32.totalorder 2, %s15
      // Predicated region
      $region41: #{tpu_custom_call.1} parent=5 // pred_check
        %p231 = pneg %p230
      $region42: #{tpu_custom_call.1} parent=5 // pred_check_branch
        %233 = sbr.rel (%p231) target = $region44
      $region43: #{tpu_custom_call.1} parent=5 // pred_region
        %s234 = ssub.s32 %s15, 2
        // Predicated region
        $region45: #{tpu_custom_call.1} parent=43 // pred_check
          %p235 = pneg %p112
        $region46: #{tpu_custom_call.1} parent=43 // pred_check_branch
          %237 = sbr.rel (%p235) target = $region48
        $region47: #{tpu_custom_call.1} parent=43 // pred_region
          %s238 = sand.u32 %s97, 1
          %s239 = scalar_lea.sflag [#allocation4], %s238
          %s240 = sand.u32 %s97, 1
          %s241 = smul.addr %s240, 8
          %s242 = scalar_lea.vmem [#allocation5], %s241
          %243 = dma.done %s239, 128
        $region48: #{tpu_custom_call.1} parent=43 // pred_fallthru
          _
      $region44: #{tpu_custom_call.1} parent=5 // pred_fallthru
        _
    $region6: #{tpu_custom_call.1} parent=1 // loop_footer
      %s19 = sadd.s32 1, %s15
    $region7: #{tpu_custom_call.1} parent=1 // loop_footer_branch
      %14 = sbr.rel target = $region3
    $region8: #{tpu_custom_call.1} parent=1 // loop_exit
      _
    %244 = vsyncpa [#allocation3], 1
    %s245 = scalar_lea.sflag [#allocation3], 1
    %246 = vsyncpa %s245, 1
    %247 = vsyncpa [#allocation4], 1
    %s248 = scalar_lea.sflag [#allocation4], 1
    %249 = vsyncpa %s248, 1

</llo_original>
